<compile_context>
chip_gen: v6e
topology: v6e:2x2x1
jax: 0.10.0
libtpu: 0.0.40
codegen_flags: <defaults>
</compile_context>

<pallas_src>
import jax
import jax.numpy as jnp
import numpy as np
from jax.experimental import pallas as pl
from jax.experimental.pallas import tpu as pltpu


def _atten_kernel(u_ref, m_ref, w1_ref, b1_ref, w2_ref, b2_ref,
                  w3_ref, b3_ref, att_ref, wts_ref):
    TB, N, D = u_ref.shape

    u = u_ref[...].astype(jnp.float32)             # (TB, N, D)
    m = m_ref[...].astype(jnp.float32)             # (TB, D)

    # --- fc1 + tanh  (embedding_1; dropout == identity in eval) -------------
    W_u = jnp.tanh(
        jnp.dot(u.reshape(TB * N, D), w1_ref[...],
                preferred_element_type=jnp.float32)
        + b1_ref[...]).reshape(TB, N, D)           # (TB, N, D)

    # --- fc2 + tanh fused with the fc3 weight --------------------------------
    # g = tanh(m @ W2 + b2) * w3 ; then a_u = sum_d(W_u * g) + b3.
    # Same math as h_u = W_u * W_u_m ; a_u = h_u @ w3 + b3, without h_u.
    g = jnp.tanh(
        jnp.dot(m, w2_ref[...], preferred_element_type=jnp.float32)
        + b2_ref[...]) * w3_ref[...]               # (TB, D)

    a_u = jnp.sum(W_u * g[:, None, :], axis=-1) + b3_ref[0, 0]   # (TB, N)

    # --- softmax over regions (dim=1) ----------------------------------------
    a_max = jnp.max(a_u, axis=1, keepdims=True)
    e = jnp.exp(a_u - a_max)
    inv_den = 1.0 / jnp.sum(e, axis=1, keepdims=True)   # exact (TB, 1) reciprocal
    weights = e * inv_den                                # (TB, N)

    # --- attention-weighted sum over regions ----------------------------------
    u_att = jnp.sum(weights[:, :, None] * u, axis=1)     # (TB, D)

    # --- l2 normalization along the feature dim --------------------------------
    norm = jnp.sqrt(jnp.sum(u_att * u_att, axis=-1, keepdims=True)) + 1e-8
    inv_norm = 1.0 / norm                                 # exact (TB, 1) reciprocal
    att_ref[...] = (u_att * inv_norm).astype(att_ref.dtype)
    wts_ref[...] = weights.astype(wts_ref.dtype)


def _pick_batch_tile(B, N, D, block_budget_bytes=4 << 20):
    """Largest batch tile such that one f32 u_t block stays under a fixed VMEM
    budget (safe with double buffering on v7x's 64 MiB VMEM), divides B, and
    satisfies the (8, 128) sublane rule for the 2-D (TB, D)/(TB, N) blocks."""
    per_row = N * D * 4
    cap = max(1, block_budget_bytes // per_row)
    if B <= cap:
        return B                       # full batch dim is always a legal block
    tb = (cap // 8) * 8
    while tb >= 8:
        if B % tb == 0:
            return tb
        tb -= 8
    return B                           # fall back: full batch (no tiling)


def t_single_modal_atten(u_t, m_u, params):
    """Pallas wrapper. u_t: (B, N, D), m_u: (B, D). Returns (u_att, weights)."""
    w1, b1, w2, b2, w3, b3 = params
    B, N, D = u_t.shape
    TB = _pick_batch_tile(B, N, D)
    grid = (B // TB,)

    const = lambda shape: pl.BlockSpec(shape, lambda i: tuple(0 for _ in shape))

    out_shapes = (jax.ShapeDtypeStruct((B, D), jnp.float32),   # u_att
                  jax.ShapeDtypeStruct((B, N), jnp.float32))   # weights

    u_att, weights = pl.pallas_call(
        _atten_kernel,
        grid=grid,
        in_specs=[
            pl.BlockSpec((TB, N, D), lambda i: (i, 0, 0)),      # u_t (tiled on B)
            pl.BlockSpec((TB, D), lambda i: (i, 0)),            # m_u (tiled on B)
            const((D, D)),                                      # w1 (VMEM-resident)
            const((1, D)),                                      # b1
            const((D, D)),                                      # w2
            const((1, D)),                                      # b2
            const((1, D)),                                      # w3 (fc3 weight row)
            pl.BlockSpec(memory_space=pltpu.MemorySpace.SMEM),  # b3 scalar in SMEM
        ],
        out_specs=(
            pl.BlockSpec((TB, D), lambda i: (i, 0)),            # u_att
            pl.BlockSpec((TB, N), lambda i: (i, 0)),            # weights
        ),
        out_shape=out_shapes,
        compiler_params=pltpu.CompilerParams(
            dimension_semantics=("parallel",)),  # batch rows independent -> megacore
    )(u_t, m_u, w1, b1, w2, b2, w3, b3)
    return u_att, weights


def init_params(key, embed_dim):
    """Deterministic synthetic parameters (PyTorch-Linear-like uniform init)."""
    ks = jax.random.split(key, 6)
    bound = 1.0 / np.sqrt(embed_dim)
    w1 = jax.random.uniform(ks[0], (embed_dim, embed_dim), jnp.float32, -bound, bound)
    b1 = jax.random.uniform(ks[1], (1, embed_dim), jnp.float32, -bound, bound)
    w2 = jax.random.uniform(ks[2], (embed_dim, embed_dim), jnp.float32, -bound, bound)
    b2 = jax.random.uniform(ks[3], (1, embed_dim), jnp.float32, -bound, bound)
    w3 = jax.random.uniform(ks[4], (1, embed_dim), jnp.float32, -bound, bound)
    b3 = jax.random.uniform(ks[5], (1, 1), jnp.float32, -bound, bound)
    return (w1, b1, w2, b2, w3, b3)


def reference(u_t, m_u, params):
    """Pure-JAX reference of the PyTorch forward (eval mode)."""
    w1, b1, w2, b2, w3, b3 = params
    u_t = u_t.astype(jnp.float32)
    m_u = m_u.astype(jnp.float32)
    W_u = jnp.tanh(u_t @ w1 + b1[0])                       # (B, N, D)
    W_u_m = jnp.tanh(m_u @ w2 + b2[0])                     # (B, D)
    h_u = W_u * W_u_m[:, None, :]
    a_u = jnp.einsum('bnd,d->bn', h_u, w3[0]) + b3[0, 0]   # (B, N)
    weights = jax.nn.softmax(a_u, axis=1)
    u_att = jnp.sum(weights[:, :, None] * u_t, axis=1)
    norm = jnp.sqrt(jnp.sum(u_att * u_att, axis=-1, keepdims=True)) + 1e-8
    return u_att / norm, weights


if __name__ == "__main__":
    B, N, D = 2, 8, 32   # batch, num_regions, embed_dim
    key = jax.random.PRNGKey(0)
    k_u, k_m, k_p = jax.random.split(key, 3)

    u_t = jax.random.normal(k_u, (B, N, D), jnp.float32)
    m_u = jax.random.normal(k_m, (B, D), jnp.float32)
    params = init_params(k_p, D)

    u_att, weights = t_single_modal_atten(u_t, m_u, params)
    u_att = jax.block_until_ready(u_att)
    weights = jax.block_until_ready(weights)

    u_att_ref, weights_ref = reference(u_t, m_u, params)
    np.testing.assert_allclose(np.asarray(u_att), np.asarray(u_att_ref),
                               rtol=1e-5, atol=1e-5)
    np.testing.assert_allclose(np.asarray(weights), np.asarray(weights_ref),
                               rtol=1e-5, atol=1e-5)
    print("KERNEL_OK")
</pallas_src>

<mosaic_0001>
module attributes {stable_mosaic.version = 11 : i64} {
  func.func @_atten_kernel(%arg0: i32, %arg1: memref<2x8x32xf32, #tpu.memory_space<vmem>>, %arg2: memref<2x32xf32, #tpu.memory_space<vmem>>, %arg3: memref<32x32xf32, #tpu.memory_space<vmem>>, %arg4: memref<1x32xf32, #tpu.memory_space<vmem>>, %arg5: memref<32x32xf32, #tpu.memory_space<vmem>>, %arg6: memref<1x32xf32, #tpu.memory_space<vmem>>, %arg7: memref<1x32xf32, #tpu.memory_space<vmem>>, %arg8: memref<1x1xf32, #tpu.memory_space<smem>>, %arg9: memref<2x32xf32, #tpu.memory_space<vmem>>, %arg10: memref<2x8xf32, #tpu.memory_space<vmem>>) attributes {dimension_semantics = [#tpu.dimension_semantics<parallel>], iteration_bounds = array<i64: 1>, scalar_prefetch = 0 : i64, scratch_operands = 0 : i64, tpu.core_type = #tpu.core_type<tc>, window_params = [{transform_indices = @transform_0, window_bounds = array<i64: 2, 8, 32>}, {transform_indices = @transform_1, window_bounds = array<i64: 2, 32>}, {pipeline_mode = #tpu.pipeline_mode<synchronous>, transform_indices = @transform_2, window_bounds = array<i64: 32, 32>}, {pipeline_mode = #tpu.pipeline_mode<synchronous>, transform_indices = @transform_3, window_bounds = array<i64: 1, 32>}, {pipeline_mode = #tpu.pipeline_mode<synchronous>, transform_indices = @transform_4, window_bounds = array<i64: 32, 32>}, {pipeline_mode = #tpu.pipeline_mode<synchronous>, transform_indices = @transform_5, window_bounds = array<i64: 1, 32>}, {pipeline_mode = #tpu.pipeline_mode<synchronous>, transform_indices = @transform_6, window_bounds = array<i64: 1, 32>}, {transform_indices = @transform_7, window_bounds = array<i64: 1, 1>}, {transform_indices = @transform_8, window_bounds = array<i64: 2, 32>}, {transform_indices = @transform_9, window_bounds = array<i64: 2, 8>}]} {
    %c0 = arith.constant 0 : index
    %c0_0 = arith.constant 0 : index
    %c0_1 = arith.constant 0 : index
    %0 = vector.load %arg1[%c0, %c0_0, %c0_1] : memref<2x8x32xf32, #tpu.memory_space<vmem>>, vector<2x8x32xf32>
    %c0_2 = arith.constant 0 : index
    %c0_3 = arith.constant 0 : index
    %1 = vector.load %arg2[%c0_2, %c0_3] : memref<2x32xf32, #tpu.memory_space<vmem>>, vector<2x32xf32>
    %2 = vector.shape_cast %0 : vector<2x8x32xf32> to vector<16x32xf32>
    %c0_4 = arith.constant 0 : index
    %c0_5 = arith.constant 0 : index
    %3 = vector.load %arg3[%c0_4, %c0_5] : memref<32x32xf32, #tpu.memory_space<vmem>>, vector<32x32xf32>
    %cst = arith.constant dense<0.000000e+00> : vector<16x32xf32>
    %4 = tpu.matmul %2, %3, %cst {dimension_numbers = #tpu.dot_dimension_numbers<[1], [0], [0], [1], [0, 0, 1, 1], [], []>} : vector<16x32xf32>, vector<32x32xf32>, vector<16x32xf32> -> vector<16x32xf32>
    %c0_6 = arith.constant 0 : index
    %c0_7 = arith.constant 0 : index
    %5 = vector.load %arg4[%c0_6, %c0_7] : memref<1x32xf32, #tpu.memory_space<vmem>>, vector<1x32xf32>
    %6 = vector.broadcast %5 : vector<1x32xf32> to vector<16x32xf32>
    %7 = arith.addf %4, %6 : vector<16x32xf32>
    %8 = math.tanh %7 : vector<16x32xf32>
    %9 = vector.shape_cast %8 : vector<16x32xf32> to vector<2x8x32xf32>
    %c0_8 = arith.constant 0 : index
    %c0_9 = arith.constant 0 : index
    %10 = vector.load %arg5[%c0_8, %c0_9] : memref<32x32xf32, #tpu.memory_space<vmem>>, vector<32x32xf32>
    %cst_10 = arith.constant dense<0.000000e+00> : vector<2x32xf32>
    %11 = tpu.matmul %1, %10, %cst_10 {dimension_numbers = #tpu.dot_dimension_numbers<[1], [0], [0], [1], [0, 0, 1, 1], [], []>} : vector<2x32xf32>, vector<32x32xf32>, vector<2x32xf32> -> vector<2x32xf32>
    %c0_11 = arith.constant 0 : index
    %c0_12 = arith.constant 0 : index
    %12 = vector.load %arg6[%c0_11, %c0_12] : memref<1x32xf32, #tpu.memory_space<vmem>>, vector<1x32xf32>
    %13 = vector.broadcast %12 : vector<1x32xf32> to vector<2x32xf32>
    %14 = arith.addf %11, %13 : vector<2x32xf32>
    %15 = math.tanh %14 : vector<2x32xf32>
    %c0_13 = arith.constant 0 : index
    %c0_14 = arith.constant 0 : index
    %16 = vector.load %arg7[%c0_13, %c0_14] : memref<1x32xf32, #tpu.memory_space<vmem>>, vector<1x32xf32>
    %17 = vector.broadcast %16 : vector<1x32xf32> to vector<2x32xf32>
    %18 = arith.mulf %15, %17 : vector<2x32xf32>
    %19 = vector.shape_cast %18 : vector<2x32xf32> to vector<2x1x32xf32>
    %20 = vector.broadcast %19 : vector<2x1x32xf32> to vector<2x8x32xf32>
    %21 = arith.mulf %9, %20 : vector<2x8x32xf32>
    %cst_15 = arith.constant dense<0.000000e+00> : vector<2x8xf32>
    %22 = vector.multi_reduction <add>, %21, %cst_15 [2] : vector<2x8x32xf32> to vector<2x8xf32>
    %c0_16 = arith.constant 0 : index
    %c0_17 = arith.constant 0 : index
    %23 = memref.load %arg8[%c0_16, %c0_17] : memref<1x1xf32, #tpu.memory_space<smem>>
    %24 = vector.broadcast %23 : f32 to vector<2x8xf32>
    %25 = arith.addf %22, %24 : vector<2x8xf32>
    %cst_18 = arith.constant dense<0xFF800000> : vector<2xf32>
    %26 = vector.multi_reduction <maximumf>, %25, %cst_18 [1] : vector<2x8xf32> to vector<2xf32>
    %27 = vector.shape_cast %26 : vector<2xf32> to vector<2x1xf32>
    %28 = vector.broadcast %27 : vector<2x1xf32> to vector<2x8xf32>
    %29 = arith.subf %25, %28 : vector<2x8xf32>
    %30 = math.exp %29 : vector<2x8xf32>
    %cst_19 = arith.constant dense<0.000000e+00> : vector<2xf32>
    %31 = vector.multi_reduction <add>, %30, %cst_19 [1] : vector<2x8xf32> to vector<2xf32>
    %32 = vector.shape_cast %31 : vector<2xf32> to vector<2x1xf32>
    %cst_20 = arith.constant 1.000000e+00 : f32
    %33 = vector.broadcast %cst_20 : f32 to vector<2x1xf32>
    %34 = arith.divf %33, %32 : vector<2x1xf32>
    %35 = vector.broadcast %34 : vector<2x1xf32> to vector<2x8xf32>
    %36 = arith.mulf %30, %35 : vector<2x8xf32>
    %37 = vector.shape_cast %36 : vector<2x8xf32> to vector<2x8x1xf32>
    %38 = vector.broadcast %37 : vector<2x8x1xf32> to vector<2x8x32xf32>
    %39 = arith.mulf %38, %0 : vector<2x8x32xf32>
    %cst_21 = arith.constant dense<0.000000e+00> : vector<2x32xf32>
    %40 = vector.multi_reduction <add>, %39, %cst_21 [1] : vector<2x8x32xf32> to vector<2x32xf32>
    %41 = arith.mulf %40, %40 : vector<2x32xf32>
    %cst_22 = arith.constant dense<0.000000e+00> : vector<2xf32>
    %42 = vector.multi_reduction <add>, %41, %cst_22 [1] : vector<2x32xf32> to vector<2xf32>
    %43 = vector.shape_cast %42 : vector<2xf32> to vector<2x1xf32>
    %44 = math.sqrt %43 : vector<2x1xf32>
    %cst_23 = arith.constant 9.99999993E-9 : f32
    %45 = vector.broadcast %cst_23 : f32 to vector<2x1xf32>
    %46 = arith.addf %44, %45 : vector<2x1xf32>
    %cst_24 = arith.constant 1.000000e+00 : f32
    %47 = vector.broadcast %cst_24 : f32 to vector<2x1xf32>
    %48 = arith.divf %47, %46 : vector<2x1xf32>
    %49 = vector.broadcast %48 : vector<2x1xf32> to vector<2x32xf32>
    %50 = arith.mulf %40, %49 : vector<2x32xf32>
    %c0_25 = arith.constant 0 : index
    %c0_26 = arith.constant 0 : index
    %51 = vector.load %arg9[%c0_25, %c0_26] : memref<2x32xf32, #tpu.memory_space<vmem>>, vector<2x32xf32>
    tpu.vector_store %arg9[%c0_25, %c0_26], %50 {strides = array<i32>} : memref<2x32xf32, #tpu.memory_space<vmem>>, vector<2x32xf32>,
    %c0_27 = arith.constant 0 : index
    %c0_28 = arith.constant 0 : index
    %52 = vector.load %arg10[%c0_27, %c0_28] : memref<2x8xf32, #tpu.memory_space<vmem>>, vector<2x8xf32>
    tpu.vector_store %arg10[%c0_27, %c0_28], %36 {strides = array<i32>} : memref<2x8xf32, #tpu.memory_space<vmem>>, vector<2x8xf32>,
    return
  }
  func.func @transform_0(%arg0: i32) -> (i32, i32, i32) {
    %c0_i32 = arith.constant 0 : i32
    %c0_i32_0 = arith.constant 0 : i32
    %c0_i32_1 = arith.constant 0 : i32
    return %arg0, %c0_i32, %c0_i32_0 : i32, i32, i32
  }
  func.func @transform_1(%arg0: i32) -> (i32, i32) {
    %c0_i32 = arith.constant 0 : i32
    %c0_i32_0 = arith.constant 0 : i32
    return %arg0, %c0_i32 : i32, i32
  }
  func.func @transform_2(%arg0: i32) -> (i32, i32) {
    %c0_i32 = arith.constant 0 : i32
    %c0_i32_0 = arith.constant 0 : i32
    %c0_i32_1 = arith.constant 0 : i32
    return %c0_i32, %c0_i32_0 : i32, i32
  }
  func.func @transform_3(%arg0: i32) -> (i32, i32) {
    %c0_i32 = arith.constant 0 : i32
    %c0_i32_0 = arith.constant 0 : i32
    %c0_i32_1 = arith.constant 0 : i32
    return %c0_i32, %c0_i32_0 : i32, i32
  }
  func.func @transform_4(%arg0: i32) -> (i32, i32) {
    %c0_i32 = arith.constant 0 : i32
    %c0_i32_0 = arith.constant 0 : i32
    %c0_i32_1 = arith.constant 0 : i32
    return %c0_i32, %c0_i32_0 : i32, i32
  }
  func.func @transform_5(%arg0: i32) -> (i32, i32) {
    %c0_i32 = arith.constant 0 : i32
    %c0_i32_0 = arith.constant 0 : i32
    %c0_i32_1 = arith.constant 0 : i32
    return %c0_i32, %c0_i32_0 : i32, i32
  }
  func.func @transform_6(%arg0: i32) -> (i32, i32) {
    %c0_i32 = arith.constant 0 : i32
    %c0_i32_0 = arith.constant 0 : i32
    %c0_i32_1 = arith.constant 0 : i32
    return %c0_i32, %c0_i32_0 : i32, i32
  }
  func.func @transform_7(%arg0: i32) -> (i32, i32) {
    %c0_i32 = arith.constant 0 : i32
    %c0_i32_0 = arith.constant 0 : i32
    %c0_i32_1 = arith.constant 0 : i32
    return %c0_i32, %c0_i32_0 : i32, i32
  }
  func.func @transform_8(%arg0: i32) -> (i32, i32) {
    %c0_i32 = arith.constant 0 : i32
    %c0_i32_0 = arith.constant 0 : i32
    return %arg0, %c0_i32 : i32, i32
  }
  func.func @transform_9(%arg0: i32) -> (i32, i32) {
    %c0_i32 = arith.constant 0 : i32
    %c0_i32_0 = arith.constant 0 : i32
    return %arg0, %c0_i32 : i32, i32
  }
}

</mosaic_0001>

<llo_original>
// kernel: tpu_custom_call.1
$region0: #{tpu_custom_call.1}
  #allocation0 [shape = 'u32[]', space=smem, size = 0x4, offset = 0x4, fixed_abs, tag = 'smem constant byte address 0x4 - core index']
  #allocation1 [shape = 'u32[144,128]{1,0:T(1,128)}', space=vmem, size = 0x12000, scoped, tag = 'internal scratch']
  #allocation2 [shape = 'f32[1,1]{1,0:T(1,128)S(6)}', space=smem, size = 0x200, scoped, tag = 'scoped memory for tpu_custom_call.1']
  %s0 = inlined_call_operand.hbm [shape: f32[2,8,32], index: 0, kind: input, shape index: {}]
  %s1 = inlined_call_operand.vmem [shape: f32[2,32], index: 1, kind: input, shape index: {}]
  %s2 = inlined_call_operand.hbm [shape: f32[32,32], index: 2, kind: input, shape index: {}]
  %s3 = inlined_call_operand.vmem [shape: f32[1,32], index: 3, kind: input, shape index: {}]
  %s4 = inlined_call_operand.hbm [shape: f32[32,32], index: 4, kind: input, shape index: {}]
  %s5 = inlined_call_operand.vmem [shape: f32[1,32], index: 5, kind: input, shape index: {}]
  %s6 = inlined_call_operand.vmem [shape: f32[1,32], index: 6, kind: input, shape index: {}]
  %s7 = inlined_call_operand.<no memory space> [shape: f32[1,1], index: 7, kind: input, shape index: {}]
  %s8 = inlined_call_operand.hbm [shape: f32[2,32], index: 8, kind: output, shape index: {0}]
  %s9 = inlined_call_operand.hbm [shape: f32[2,8], index: 9, kind: output, shape index: {1}]
  %10 = xla_tuple %s8, %s9
  %s11 = sld [smem:[#allocation0]]
  $region62: #{tpu_custom_call.1} parent=0
    _
  %s13 = ssub.s32 1, %s11
  %s14 = scalar_select 0, %s13, %s11
  %15 = sst [smem:[#allocation2]] %s7
  $region1: #{tpu_custom_call.1} parent=0
    #allocation3 [shape = 'u8[8192]{0}', space=vmem, size = 0x2000, scoped, tag = 'input window, operand 0, single buffered']
    #allocation4 [shape = 's32[1]{0}', space=sflag, size = 0x4, scoped, tag = 'scoped memory for tpu_custom_call.1']
    #allocation5 [shape = 's32[1]{0}', space=sflag, size = 0x4, scoped, tag = 'scoped memory for tpu_custom_call.1']
    #allocation6 [shape = 'u8[16384]{0}', space=vmem, size = 0x4000, scoped, tag = 'input window, operand 2, single buffered']
    #allocation7 [shape = 's32[1]{0}', space=sflag, size = 0x4, scoped, tag = 'scoped memory for tpu_custom_call.1']
    #allocation8 [shape = 'u8[16384]{0}', space=vmem, size = 0x4000, scoped, tag = 'input window, operand 4, single buffered']
    #allocation9 [shape = 'u8[1024]{0}', space=vmem, size = 0x400, scoped, tag = 'output window, operand 0, single buffered']
    #allocation10 [shape = 'u8[1024]{0}', space=vmem, size = 0x400, scoped, tag = 'output window, operand 1, single buffered']
    #allocation11 [shape = 's32[1]{0}', space=sflag, size = 0x4, scoped, tag = 'scoped memory for tpu_custom_call.1']
    %16 = vsyncpa [#allocation4], 0
    %17 = vsyncpa [#allocation7], 0
    %18 = vsyncpa [#allocation5], 0
    %19 = vsyncpa [#allocation11], 0
    // Predicated region
    $region2: #{tpu_custom_call.1} parent=1 // pred_check
      _
    $region3: #{tpu_custom_call.1} parent=1 // pred_check_branch
      %21 = sbr.rel (0) target = $region5
    $region4: #{tpu_custom_call.1} parent=1 // pred_region
      %s23 = ssub.s32 256, 256
      %24 = vsyncadd [#allocation4], %s23
      %s25 = sshll.u32 [#allocation3], 4
      %s26 = int_to_ptr.vmem [resolvable:$true] %s25
      %31 = dma.hbm_to_vmem [thread:$0]  %s0, 256, %s26, [#allocation4], 128, 128, 8
    $region5: #{tpu_custom_call.1} parent=1 // pred_fallthru
      _
    // Predicated region
    $region6: #{tpu_custom_call.1} parent=1 // pred_check
      _
    $region7: #{tpu_custom_call.1} parent=1 // pred_check_branch
      %33 = sbr.rel (0) target = $region9
    $region8: #{tpu_custom_call.1} parent=1 // pred_region
      _
    $region9: #{tpu_custom_call.1} parent=1 // pred_fallthru
      _
    // Predicated region
    $region10: #{tpu_custom_call.1} parent=1 // pred_check
      _
    $region11: #{tpu_custom_call.1} parent=1 // pred_check_branch
      %35 = sbr.rel (0) target = $region13
    $region12: #{tpu_custom_call.1} parent=1 // pred_region
      %s37 = ssub.s32 512, 512
      %38 = vsyncadd [#allocation7], %s37
      %s39 = sshll.u32 [#allocation6], 4
      %s40 = int_to_ptr.vmem [resolvable:$true] %s39
      %45 = dma.hbm_to_vmem [thread:$0]  %s2, 512, %s40, [#allocation7], 128, 128, 8
    $region13: #{tpu_custom_call.1} parent=1 // pred_fallthru
      _
    // Predicated region
    $region14: #{tpu_custom_call.1} parent=1 // pred_check
      _
    $region15: #{tpu_custom_call.1} parent=1 // pred_check_branch
      %47 = sbr.rel (0) target = $region17
    $region16: #{tpu_custom_call.1} parent=1 // pred_region
      _
    $region17: #{tpu_custom_call.1} parent=1 // pred_fallthru
      _
    // Predicated region
    $region18: #{tpu_custom_call.1} parent=1 // pred_check
      _
    $region19: #{tpu_custom_call.1} parent=1 // pred_check_branch
      %49 = sbr.rel (0) target = $region21
    $region20: #{tpu_custom_call.1} parent=1 // pred_region
      %s51 = ssub.s32 512, 512
      %52 = vsyncadd [#allocation7], %s51
      %s53 = sshll.u32 [#allocation8], 4
      %s54 = int_to_ptr.vmem [resolvable:$true] %s53
      %59 = dma.hbm_to_vmem [thread:$0]  %s4, 512, %s54, [#allocation7], 128, 128, 8
    $region21: #{tpu_custom_call.1} parent=1 // pred_fallthru
      _
    // Predicated region
    $region22: #{tpu_custom_call.1} parent=1 // pred_check
      _
    $region23: #{tpu_custom_call.1} parent=1 // pred_check_branch
      %61 = sbr.rel (0) target = $region25
    $region24: #{tpu_custom_call.1} parent=1 // pred_region
      _
    $region25: #{tpu_custom_call.1} parent=1 // pred_fallthru
      _
    // Predicated region
    $region26: #{tpu_custom_call.1} parent=1 // pred_check
      _
    $region27: #{tpu_custom_call.1} parent=1 // pred_check_branch
      %63 = sbr.rel (0) target = $region29
    $region28: #{tpu_custom_call.1} parent=1 // pred_region
      _
    $region29: #{tpu_custom_call.1} parent=1 // pred_fallthru
      _
    // Predicated region
    $region30: #{tpu_custom_call.1} parent=1 // pred_check
      _
    $region31: #{tpu_custom_call.1} parent=1 // pred_check_branch
      %65 = sbr.rel (0) target = $region33
    $region32: #{tpu_custom_call.1} parent=1 // pred_region
      _
    $region33: #{tpu_custom_call.1} parent=1 // pred_fallthru
      _
    // Predicated region
    $region34: #{tpu_custom_call.1} parent=1 // pred_check
      _
    $region35: #{tpu_custom_call.1} parent=1 // pred_check_branch
      %67 = sbr.rel (0) target = $region37
    $region36: #{tpu_custom_call.1} parent=1 // pred_region
      %68 = dma.done [#allocation4], 256
    $region37: #{tpu_custom_call.1} parent=1 // pred_fallthru
      _
    // Predicated region
    $region38: #{tpu_custom_call.1} parent=1 // pred_check
      _
    $region39: #{tpu_custom_call.1} parent=1 // pred_check_branch
      %70 = sbr.rel (0) target = $region41
    $region40: #{tpu_custom_call.1} parent=1 // pred_region
      %71 = dma.done [#allocation7], 512
    $region41: #{tpu_custom_call.1} parent=1 // pred_fallthru
      _
    // Predicated region
    $region42: #{tpu_custom_call.1} parent=1 // pred_check
      _
    $region43: #{tpu_custom_call.1} parent=1 // pred_check_branch
      %73 = sbr.rel (0) target = $region45
    $region44: #{tpu_custom_call.1} parent=1 // pred_region
      %74 = dma.done [#allocation7], 512
    $region45: #{tpu_custom_call.1} parent=1 // pred_fallthru
      _
    %v75 = vld [vmem:[#allocation3] sm:$0xff]
    %v76 = vld [vmem:[#allocation3 + $0x8] sm:$0xff]
    %v77 = vld [vmem:[%s1] sm:$0x3]
    %v78 = vld [vmem:[#allocation6] sm:$0xff]
    %v79 = vld [vmem:[#allocation6 + $0x8] sm:$0xff]
    %v80 = vld [vmem:[#allocation6 + $0x10] sm:$0xff]
    %v81 = vld [vmem:[#allocation6 + $0x18] sm:$0xff]
    %v82 = vld [vmem:[%s3] sm:$0x1]
    %v84 = vlaneseq
    %v85 = vshrl.u32 %v84, 7
    %v86 = vsub.s32 0, %v85
    %v87 = vrot.slane %v82, %v86
    %vm89 = vcmask 261120
    %v91 = vsel %vm89, %v75, 0
    %v94 = vsel %vm89, %v76, 0
    %96 = vmatprep.subr.mxu0 0.0
    %97 = vmatpush1.msra.mxu0 0.0
    %98 = vmatprep.subr.mxu0 0.0
    %99 = vmatpush1.msra.mxu0 0.0
    %100 = vmatprep.subr.mxu0 0.0
    %101 = vmatpush1.msra.mxu0 0.0
    %102 = vmatprep.subr.mxu0 0.0
    %103 = vmatpush1.msra.mxu0 0.0
    %104 = vmatprep.subr.mxu0 0.0
    %105 = vmatpush1.msra.mxu0 0.0
    %106 = vmatprep.subr.mxu0 0.0
    %107 = vmatpush1.msra.mxu0 0.0
    %108 = vmatprep.subr.mxu0 0.0
    %109 = vmatpush1.msra.mxu0 0.0
    %110 = vmatprep.subr.mxu0 0.0
    %111 = vmatpush1.msra.mxu0 0.0
    %112 = vmatprep.subr.mxu0 0.0
    %113 = vmatpush1.msra.mxu0 0.0
    %114 = vmatprep.subr.mxu0 0.0
    %115 = vmatpush1.msra.mxu0 0.0
    %116 = vmatprep.subr.mxu0 0.0
    %117 = vmatpush1.msra.mxu0 0.0
    %118 = vmatprep.subr.mxu0 0.0
    %119 = vmatpush1.msra.mxu0 0.0
    %120 = vmatprep.subr.mxu0 0.0
    %121 = vmatpush1.msra.mxu0 %v81
    %122 = vmatprep.subr.mxu0 0.0
    %123 = vmatpush1.msra.mxu0 %v80
    %124 = vmatprep.subr.mxu0 0.0
    %125 = vmatpush1.msra.mxu0 %v79
    %126 = vmatprep.subr.mxu0 0.0
    %127 = vmatpush1.msra.mxu0 %v78
    %128 = vmatprep.subr.mxu0 0.0
    %129 = vmatpush2.msra.mxu0 0.0
    %130 = vmatprep.subr.mxu0 0.0
    %131 = vmatpush2.msra.mxu0 0.0
    %132 = vmatprep.subr.mxu0 0.0
    %133 = vmatpush2.msra.mxu0 0.0
    %134 = vmatprep.subr.mxu0 0.0
    %135 = vmatpush2.msra.mxu0 0.0
    %136 = vmatprep.subr.mxu0 0.0
    %137 = vmatpush2.msra.mxu0 0.0
    %138 = vmatprep.subr.mxu0 0.0
    %139 = vmatpush2.msra.mxu0 0.0
    %140 = vmatprep.subr.mxu0 0.0
    %141 = vmatpush2.msra.mxu0 0.0
    %142 = vmatprep.subr.mxu0 0.0
    %143 = vmatpush2.msra.mxu0 0.0
    %144 = vmatprep.subr.mxu0 0.0
    %145 = vmatpush2.msra.mxu0 0.0
    %146 = vmatprep.subr.mxu0 0.0
    %147 = vmatpush2.msra.mxu0 0.0
    %148 = vmatprep.subr.mxu0 0.0
    %149 = vmatpush2.msra.mxu0 0.0
    %150 = vmatprep.subr.mxu0 0.0
    %151 = vmatpush2.msra.mxu0 0.0
    %152 = vmatprep.subr.mxu0 0.0
    %153 = vmatpush2.msra.mxu0 0.0
    %154 = vmatprep.subr.mxu0 0.0
    %155 = vmatpush2.msra.mxu0 0.0
    %156 = vmatprep.subr.mxu0 0.0
    %157 = vmatpush2.msra.mxu0 0.0
    %158 = vmatprep.subr.mxu0 0.0
    %159 = vmatpush2.msra.mxu0 0.0
    %160 = vmatprep.mubr.f32.mxu0 0.0
    %161 = vmatmul.mubr.f32.gmra.mxu0 %v91
    %v162 = vpop.f32.mrf.mxu0
    %v163 = vadd.f32 %v87, %v162
    %v164 = vpop.f32.mrf.mxu0
    %165 = vmatprep.mubr.f32.mxu0 0.0
    %166 = vmatmul.mubr.f32.gmra.mxu0 %v94
    %v167 = vpop.f32.mrf.mxu0
    %v168 = vadd.f32 %v87, %v167
    %v169 = vpop.f32.mrf.mxu0
    %170 = vdwg.mxu0
    %v171 = vtanh.pop %v163
    %v172 = vtanh.pop %v168
    %v173 = vld [vmem:[#allocation8] sm:$0xff]
    %v174 = vld [vmem:[#allocation8 + $0x8] sm:$0xff]
    %v175 = vld [vmem:[#allocation8 + $0x10] sm:$0xff]
    %v176 = vld [vmem:[#allocation8 + $0x18] sm:$0xff]
    %v177 = vld [vmem:[%s5] sm:$0x1]
    %v179 = vlaneseq
    %v180 = vshrl.u32 %v179, 7
    %v181 = vsub.s32 0, %v180
    %v182 = vrot.slane %v177, %v181
    %v185 = vsel %vm89, %v77, 0
    %187 = vmatprep.subr.mxu0 0.0
    %188 = vmatpush1.msra.mxu0 0.0
    %189 = vmatprep.subr.mxu0 0.0
    %190 = vmatpush1.msra.mxu0 0.0
    %191 = vmatprep.subr.mxu0 0.0
    %192 = vmatpush1.msra.mxu0 0.0
    %193 = vmatprep.subr.mxu0 0.0
    %194 = vmatpush1.msra.mxu0 0.0
    %195 = vmatprep.subr.mxu0 0.0
    %196 = vmatpush1.msra.mxu0 0.0
    %197 = vmatprep.subr.mxu0 0.0
    %198 = vmatpush1.msra.mxu0 0.0
    %199 = vmatprep.subr.mxu0 0.0
    %200 = vmatpush1.msra.mxu0 0.0
    %201 = vmatprep.subr.mxu0 0.0
    %202 = vmatpush1.msra.mxu0 0.0
    %203 = vmatprep.subr.mxu0 0.0
    %204 = vmatpush1.msra.mxu0 0.0
    %205 = vmatprep.subr.mxu0 0.0
    %206 = vmatpush1.msra.mxu0 0.0
    %207 = vmatprep.subr.mxu0 0.0
    %208 = vmatpush1.msra.mxu0 0.0
    %209 = vmatprep.subr.mxu0 0.0
    %210 = vmatpush1.msra.mxu0 0.0
    %211 = vmatprep.subr.mxu0 0.0
    %212 = vmatpush1.msra.mxu0 %v176
    %213 = vmatprep.subr.mxu0 0.0
    %214 = vmatpush1.msra.mxu0 %v175
    %215 = vmatprep.subr.mxu0 0.0
    %216 = vmatpush1.msra.mxu0 %v174
    %217 = vmatprep.subr.mxu0 0.0
    %218 = vmatpush1.msra.mxu0 %v173
    %219 = vmatprep.subr.mxu0 0.0
    %220 = vmatpush2.msra.mxu0 0.0
    %221 = vmatprep.subr.mxu0 0.0
    %222 = vmatpush2.msra.mxu0 0.0
    %223 = vmatprep.subr.mxu0 0.0
    %224 = vmatpush2.msra.mxu0 0.0
    %225 = vmatprep.subr.mxu0 0.0
    %226 = vmatpush2.msra.mxu0 0.0
    %227 = vmatprep.subr.mxu0 0.0
    %228 = vmatpush2.msra.mxu0 0.0
    %229 = vmatprep.subr.mxu0 0.0
    %230 = vmatpush2.msra.mxu0 0.0
    %231 = vmatprep.subr.mxu0 0.0
    %232 = vmatpush2.msra.mxu0 0.0
    %233 = vmatprep.subr.mxu0 0.0
    %234 = vmatpush2.msra.mxu0 0.0
    %235 = vmatprep.subr.mxu0 0.0
    %236 = vmatpush2.msra.mxu0 0.0
    %237 = vmatprep.subr.mxu0 0.0
    %238 = vmatpush2.msra.mxu0 0.0
    %239 = vmatprep.subr.mxu0 0.0
    %240 = vmatpush2.msra.mxu0 0.0
    %241 = vmatprep.subr.mxu0 0.0
    %242 = vmatpush2.msra.mxu0 0.0
    %243 = vmatprep.subr.mxu0 0.0
    %244 = vmatpush2.msra.mxu0 0.0
    %245 = vmatprep.subr.mxu0 0.0
    %246 = vmatpush2.msra.mxu0 0.0
    %247 = vmatprep.subr.mxu0 0.0
    %248 = vmatpush2.msra.mxu0 0.0
    %249 = vmatprep.subr.mxu0 0.0
    %250 = vmatpush2.msra.mxu0 0.0
    %251 = vmatprep.mubr.f32.mxu0 0.0
    %252 = vmatmul.mubr.f32.gmra.mxu0 %v185
    %v253 = vpop.f32.mrf.mxu0
    %v254 = vadd.f32 %v182, %v253
    %v255 = vpop.f32.mrf.mxu0
    %256 = vdwg.mxu0
    %v257 = vtanh.pop %v254
    %v258 = vld [vmem:[%s6] sm:$0x1]
    %v260 = vlaneseq
    %v261 = vshrl.u32 %v260, 7
    %v262 = vsub.s32 0, %v261
    %v263 = vrot.slane %v258, %v262
    %v265 = vmul.f32 %v257, %v263
    %v268 = vunpack.c.l.s4 1966171168
    %v269 = vunpack.c.0.s8 %v268
    %v270 = vlaneseq
    %v271 = vshrl.u32 %v270, 7
    %v272 = vsub.s32 %v269, %v271
    %v273 = vrot.slane %v265, %v272
    %v274 = vcombine.high %v273, %v273
    %v276 = vunpack.c.l.s4 1966171168
    %v277 = vunpack.c.0.s8 %v276
    %v278 = vlaneseq
    %v279 = vshrl.u32 %v278, 7
    %v280 = vsub.s32 %v277, %v279
    %v281 = vrot.slane %v273, %v280
    %v283 = vunpack.c.l.s4 1966171168
    %v284 = vunpack.c.0.s8 %v283
    %v285 = vlaneseq
    %v286 = vshrl.u32 %v285, 7
    %v287 = vsub.s32 %v284, %v286
    %v288 = vrot.slane %v274, %v287
    %v289 = vlaneseq
    %v290 = vshrl.u32 %v289, 7
    %v291 = vsub.s32 0, %v290
    %v292 = vrot.slane %v281, %v291
    %v293 = vlaneseq
    %v294 = vshrl.u32 %v293, 7
    %v295 = vsub.s32 0, %v294
    %v296 = vrot.slane %v288, %v295
    %v299 = vmul.f32 %v171, %v292
    %v300 = vmul.f32 %v172, %v296
    %v301 = vsel %vm89, %v299, 0.0
    %302 = vadd.xlane.f32.xlu0 %v301
    %v303 = vpop.xlane.xlu0 %302
    %v304 = vsel %vm89, %v300, 0.0
    %305 = vadd.xlane.f32.xlu0 %v304
    %v306 = vpop.xlane.xlu0 %305
    %s307 = sld [smem:[#allocation2]]
    %v308 = vstv %s307
    %v309 = vadd.f32 %v303, %v308
    %v310 = vadd.f32 %v306, %v308
    %v313 = vlaneseq
    %v314 = vand.u32 %v313, 127
    %v315 = vlaneseq
    %v316 = vshrl.u32 %v315, 7
    %v317 = vsub.s32 %v314, %v316
    %v318 = vrot.slane %v309, %v317
    %v319 = vlaneseq
    %v320 = vshrl.u32 %v319, 7
    %v321 = vsub.s32 %v314, %v320
    %v322 = vrot.slane %v310, %v321
    %vm323 = vcmask 1041409
    %v324 = vsel %vm323, %v322, %v318
    %vm326 = vcmask 58368
    %v327 = vsel %vm326, %v324, -inf
    %328 = vmax.xlane.f32.xlu0 %v327
    %v329 = vpop.xlane.xlu0 %328
    %v331 = vlaneseq
    %v332 = vshrl.u32 %v331, 7
    %v333 = vsub.s32 0, %v332
    %v334 = vrot.slane %v329, %v333
    %v335 = vlaneseq
    %v336 = vshrl.u32 %v335, 7
    %v337 = vsub.s32 1, %v336
    %v338 = vrot.slane %v329, %v337
    %v341 = vsub.f32 %v309, %v334
    %v342 = vsub.f32 %v310, %v338
    %v343 = vmul.f32 %v341, 1.442695
    %v344 = vpow.pop %v343
    %v345 = vmul.f32 %v342, 1.442695
    %v346 = vpow.pop %v345
    %349 = vset.pattern.permute.xlu0 0
    %350 = vperm.xlu0 %349, %v344
    %v351 = vpop.permute.xlu0 %350
    %352 = vset.pattern.permute.xlu0 0
    %353 = vperm.xlu0 %352, %v346
    %v354 = vpop.permute.xlu0 %353
    %v355 = vlaneseq
    %v356 = vshrl.u32 %v355, 7
    %v357 = vsub.s32 %v314, %v356
    %v358 = vrot.slane %v351, %v357
    %v359 = vlaneseq
    %v360 = vshrl.u32 %v359, 7
    %v361 = vsub.s32 %v314, %v360
    %v362 = vrot.slane %v354, %v361
    %v363 = vsel %vm323, %v362, %v358
    %v365 = vsel %vm326, %v363, 0.0
    %366 = vadd.xlane.f32.xlu0 %v365
    %v367 = vpop.xlane.xlu0 %366
    %v368 = vrcp.pop %v367
    %v369 = vmul.f32 1.0, %v368
    %v371 = vlaneseq
    %v372 = vshrl.u32 %v371, 7
    %v373 = vsub.s32 0, %v372
    %v374 = vrot.slane %v369, %v373
    %v375 = vlaneseq
    %v376 = vshrl.u32 %v375, 7
    %v377 = vsub.s32 1, %v376
    %v378 = vrot.slane %v369, %v377
    %v381 = vmul.f32 %v344, %v374
    %v382 = vmul.f32 %v346, %v378
    %384 = vset.pattern.permute.xlu0 0
    %385 = vperm.xlu0 %384, %v381
    %v386 = vpop.permute.xlu0 %385
    %389 = vset.pattern.permute.xlu0 0
    %390 = vperm.xlu0 %389, %v382
    %v391 = vpop.permute.xlu0 %390
    %v393 = vmul.f32 %v386, %v75
    %v394 = vmul.f32 %v391, %v76
    %v395 = vsel %vm89, %v393, 0.0
    %v396 = vrot.slane %v395, 4
    %v397 = vadd.f32 %v395, %v396
    %v398 = vrot.slane %v397, 2
    %v399 = vadd.f32 %v397, %v398
    %v400 = vrot.slane %v399, 1
    %v401 = vadd.f32 %v399, %v400
    %v402 = vsel %vm89, %v394, 0.0
    %v403 = vrot.slane %v402, 4
    %v404 = vadd.f32 %v402, %v403
    %v405 = vrot.slane %v404, 2
    %v406 = vadd.f32 %v404, %v405
    %v407 = vrot.slane %v406, 1
    %v408 = vadd.f32 %v406, %v407
    %v409 = vmul.f32 %v401, %v401
    %v410 = vmul.f32 %v408, %v408
    %v413 = vsel %vm323, %v410, %v409
    %vm415 = vcmask 254976
    %v416 = vsel %vm415, %v413, 0.0
    %417 = vadd.xlane.f32.xlu0 %v416
    %v418 = vpop.xlane.xlu0 %417
    %v419 = vrsqrt.pop %v418
    %v420 = vmul.f32 %v418, %v419
    %vm421 = vcmp.eq.f32.partialorder %v418, inf
    %v422 = vsel %vm421, %v418, %v420
    %vm423 = vcmp.eq.f32.partialorder %v418, 0.0
    %v424 = vand.u32 %v418, 2147483648
    %v425 = vsel %vm423, %v424, %v422
    %v426 = vadd.f32 %v425, 1e-08
    %v427 = vrcp.pop %v426
    %v428 = vmul.f32 1.0, %v427
    %v430 = vrot.slane %v428, 1
    %v433 = vmul.f32 %v401, %v428
    %v434 = vmul.f32 %v408, %v430
    %v437 = vrot.slane %v434, 7
    %v438 = vsel %vm323, %v437, %v433
    %440 = vst.msk [vmem:[#allocation9] sm:$0x3] %vm415, %v438
    %v441 = vlaneseq
    %v442 = vshrl.u32 %v441, 7
    %v443 = vsub.s32 %v314, %v442
    %v444 = vrot.slane %v386, %v443
    %v445 = vlaneseq
    %v446 = vshrl.u32 %v445, 7
    %v447 = vsub.s32 %v314, %v446
    %v448 = vrot.slane %v391, %v447
    %v449 = vsel %vm323, %v448, %v444
    %451 = vst.msk [vmem:[#allocation10] sm:$0x3] %vm326, %v449
    // Predicated region
    $region46: #{tpu_custom_call.1} parent=1 // pred_check
      _
    $region47: #{tpu_custom_call.1} parent=1 // pred_check_branch
      %453 = sbr.rel (0) target = $region49
    $region48: #{tpu_custom_call.1} parent=1 // pred_region
      %s455 = ssub.s32 32, 32
      %456 = vsyncadd [#allocation5], %s455
      %s458 = sshll.u32 [#allocation9], 4
      %s459 = int_to_ptr.vmem [resolvable:$true] %s458
      %461 = dma.vmem_to_hbm [thread:$0]  %s459, 32, %s8, [#allocation5]
    $region49: #{tpu_custom_call.1} parent=1 // pred_fallthru
      _
    // Predicated region
    $region50: #{tpu_custom_call.1} parent=1 // pred_check
      _
    $region51: #{tpu_custom_call.1} parent=1 // pred_check_branch
      %463 = sbr.rel (0) target = $region53
    $region52: #{tpu_custom_call.1} parent=1 // pred_region
      %s465 = ssub.s32 32, 32
      %466 = vsyncadd [#allocation11], %s465
      %s468 = sshll.u32 [#allocation10], 4
      %s469 = int_to_ptr.vmem [resolvable:$true] %s468
      %471 = dma.vmem_to_hbm [thread:$0]  %s469, 32, %s9, [#allocation11]
    $region53: #{tpu_custom_call.1} parent=1 // pred_fallthru
      _
    // Predicated region
    $region54: #{tpu_custom_call.1} parent=1 // pred_check
      _
    $region55: #{tpu_custom_call.1} parent=1 // pred_check_branch
      %473 = sbr.rel (0) target = $region57
    $region56: #{tpu_custom_call.1} parent=1 // pred_region
      %474 = dma.done [#allocation5], 32
    $region57: #{tpu_custom_call.1} parent=1 // pred_fallthru
      _
    // Predicated region
    $region58: #{tpu_custom_call.1} parent=1 // pred_check
      _
    $region59: #{tpu_custom_call.1} parent=1 // pred_check_branch
      %476 = sbr.rel (0) target = $region61
    $region60: #{tpu_custom_call.1} parent=1 // pred_region
      %477 = dma.done [#allocation11], 32
    $region61: #{tpu_custom_call.1} parent=1 // pred_fallthru
      _
    %478 = vsyncpa [#allocation4], 1
    %479 = vsyncpa [#allocation7], 1
    %480 = vsyncpa [#allocation5], 1
    %481 = vsyncpa [#allocation11], 1

</llo_original>
